<compile_context>
chip_gen: v5e
topology: v5e:2x2
jax: 0.10.0
libtpu: 0.0.40
codegen_flags: <defaults>
</compile_context>

<pallas_src>
import functools

import jax
import jax.numpy as jnp
import numpy as np
from jax.experimental import pallas as pl
from jax.experimental.pallas import tpu as pltpu

LN_EPS = 1e-5
ROPE_BASE = 10000.0


def _spatial_slot_pool_kernel(x_ref, cos_ref, sin_ref, gamma_ref, beta_ref,
                              slots_ref, wro_ref, out_ref, *, mxu_dtype):
    tb, n, d = x_ref.shape
    s = slots_ref.shape[0]
    half = d // 2

    x = x_ref[...].astype(jnp.float32)                       # (TB, N, D)

    # --- one-pass LayerNorm over D (eps=1e-5, affine) ---
    # mean(x) and mean(x*x) are independent lane reductions -> they overlap.
    mu = jnp.mean(x, axis=-1, keepdims=True)                  # (TB, N, 1)
    msq = jnp.mean(x * x, axis=-1, keepdims=True)             # (TB, N, 1)
    var = jnp.maximum(msq - mu * mu, 0.0)
    scale = gamma_ref[...] * jax.lax.rsqrt(var + LN_EPS)      # (TB, N, D)
    xn = (x - mu) * scale + beta_ref[...]

    # --- RoPE: x*cos + rotate_half(x)*sin, written on the two halves so the
    #     rotate_half sign is folded into the arithmetic (no iota/where/roll).
    c = cos_ref[...]                                           # (N, D/2) fp32
    sn = sin_ref[...]                                          # (N, D/2) fp32
    x1 = xn[..., :half]
    x2 = xn[..., half:]
    xr = jnp.concatenate([x1 * c - x2 * sn, x2 * c + x1 * sn], axis=-1)

    xr_m = xr.astype(mxu_dtype)

    # --- slot pooling: logits directly in (S, N) layout -> softmax reduces
    #     over the last (lane) axis; no explicit (N,S)->(S,N) transpose.
    slots_b = jnp.broadcast_to(slots_ref[...], (tb, s, d)).astype(mxu_dtype)
    logits = jnp.einsum('bsd,bnd->bsn', slots_b, xr_m,
                        preferred_element_type=jnp.float32)    # (TB, S, N)
    m = jnp.max(logits, axis=-1, keepdims=True)
    e = jnp.exp(logits - m)
    denom = jnp.sum(e, axis=-1, keepdims=True)                 # (TB, S, 1)

    # Unnormalized pooled result; normalization deferred to the (S, D) tensor
    # (S*D multiplies instead of S*N) using the EUP approximate reciprocal.
    res = jnp.einsum('bsn,bnd->bsd', e.astype(mxu_dtype), xr_m,
                     preferred_element_type=jnp.float32)       # (TB, S, D)
    res = res * pl.reciprocal(denom, approx=True)

    # --- fused readout: single (TB*S, D) @ (D, hidden) matmul, stored as one
    #     lane-dense 2D slab.
    out = jnp.dot(res.reshape(tb * s, d).astype(mxu_dtype), wro_ref[...],
                  preferred_element_type=jnp.float32)          # (TB*S, hidden)
    out_ref[...] = out.astype(out_ref.dtype)


def spatial_slot_pool(x, slots, gamma, beta, w_readout_t, *,
                      tile_batch=None, mxu_dtype=None):
    """x: [B, T, H, W, D] or [B, T, N, D]  ->  [B, T, num_slots, hidden].

    mxu_dtype: dtype fed to the MXU matmuls (accumulation stays fp32).  Defaults
    to x.dtype; pass jnp.bfloat16 on v6e/v7x for full MXU throughput.
    """
    b, t = x.shape[0], x.shape[1]
    n = x.shape[2] * x.shape[3] if x.ndim == 5 else x.shape[2]
    d = x.shape[-1]
    half = d // 2
    s = slots.shape[1]
    hidden = w_readout_t.shape[1]
    bt = b * t

    if mxu_dtype is None:
        mxu_dtype = x.dtype

    x_flat = x.reshape(bt, n, d)

    # Batch TB slabs per grid step; cap so the grid keeps >= 2 steps when
    # possible so the parallel axis can shard across both v7x TensorCores.
    if tile_batch is None:
        tile_batch = min(8, bt)
        if bt > 1:
            tile_batch = max(1, min(tile_batch, pl.cdiv(bt, 2)))
    tb = max(1, tile_batch)
    grid = pl.cdiv(bt, tb)
    bt_pad = grid * tb
    if bt_pad != bt:
        # Zero padding is numerically safe through LN/RoPE/softmax; padded
        # rows are dropped after the call.
        x_flat = jnp.pad(x_flat, ((0, bt_pad - bt), (0, 0), (0, 0)))

    # Rotary half-caches in fp32 (grid-invariant; tiny).  Because the kernel
    # uses the half-split RoPE formula, only the first half of cos/sin is
    # needed and the rotate_half sign never materializes.
    inv_freq = 1.0 / (ROPE_BASE ** (jnp.arange(0, d, 2, dtype=jnp.float32) / d))
    pos = jnp.arange(n, dtype=jnp.float32)
    freqs = jnp.outer(pos, inv_freq)                           # (N, D/2)
    cos_h = jnp.cos(freqs)                                     # fp32 always
    sin_h = jnp.sin(freqs)

    gamma32 = gamma.reshape(1, d).astype(jnp.float32)
    beta32 = beta.reshape(1, d).astype(jnp.float32)
    slots_sd = slots.T.astype(mxu_dtype)                       # (S, D)
    wro = w_readout_t.astype(mxu_dtype)                        # (D, hidden)

    kernel = functools.partial(_spatial_slot_pool_kernel, mxu_dtype=mxu_dtype)

    out2d = pl.pallas_call(
        kernel,
        out_shape=jax.ShapeDtypeStruct((bt_pad * s, hidden), x.dtype),
        grid_spec=pltpu.PrefetchScalarGridSpec(
            num_scalar_prefetch=0,
            grid=(grid,),
            in_specs=[
                pl.BlockSpec((tb, n, d), lambda i: (i, 0, 0)),      # x slabs
                pl.BlockSpec((n, half), lambda i: (0, 0)),          # cos half
                pl.BlockSpec((n, half), lambda i: (0, 0)),          # sin half
                pl.BlockSpec((1, d), lambda i: (0, 0)),             # ln gamma
                pl.BlockSpec((1, d), lambda i: (0, 0)),             # ln beta
                pl.BlockSpec((s, d), lambda i: (0, 0)),             # slots^T
                pl.BlockSpec((d, hidden), lambda i: (0, 0)),        # readout W^T
            ],
            # Lane-dense 2D output slab: (TB*S, hidden) per step.
            out_specs=pl.BlockSpec((tb * s, hidden), lambda i: (i, 0)),
        ),
        compiler_params=pltpu.CompilerParams(
            dimension_semantics=("parallel",)),
    )(x_flat, cos_h, sin_h, gamma32, beta32, slots_sd, wro)

    out = out2d.reshape(bt_pad, s, hidden)[:bt]
    return out.reshape(b, t, s, hidden)


def _reference(x, slots, gamma, beta, w_readout_t):
    """Pure-JAX reference mirroring the PyTorch forward."""
    b, t = x.shape[0], x.shape[1]
    n = x.shape[2] * x.shape[3] if x.ndim == 5 else x.shape[2]
    d = x.shape[-1]
    xf = x.reshape(b * t, n, d).astype(jnp.float32)
    mu = jnp.mean(xf, axis=-1, keepdims=True)
    var = jnp.mean((xf - mu) ** 2, axis=-1, keepdims=True)
    xn = (xf - mu) / jnp.sqrt(var + LN_EPS) * gamma + beta
    inv_freq = 1.0 / (ROPE_BASE ** (jnp.arange(0, d, 2, dtype=jnp.float32) / d))
    freqs = jnp.outer(jnp.arange(n, dtype=jnp.float32), inv_freq)
    emb = jnp.concatenate([freqs, freqs], axis=-1)
    cos, sin = jnp.cos(emb), jnp.sin(emb)
    x1, x2 = xn[..., :d // 2], xn[..., d // 2:]
    rot = jnp.concatenate([-x2, x1], axis=-1)
    xr = xn * cos + rot * sin
    logits = jnp.einsum('bnd,ds->bns', xr, slots)
    p = jax.nn.softmax(logits, axis=1)
    res = jnp.einsum('bns,bnd->bsd', p, xr)
    out = jnp.einsum('bsd,dh->bsh', res, w_readout_t)
    return out.reshape(b, t, slots.shape[1], w_readout_t.shape[1])


if __name__ == "__main__":
    # Small shapes: B=2, T=3, H=W=4 (N=16), mm_hidden=64, hidden=128, num_slots=8
    B, T, H, W = 2, 3, 4, 4
    MM_HIDDEN, HIDDEN, NUM_SLOTS = 64, 128, 8

    key = jax.random.PRNGKey(0)
    kx, ks, kw = jax.random.split(key, 3)

    x = jax.random.normal(kx, (B, T, H, W, MM_HIDDEN), dtype=jnp.float32)
    slots = jax.random.normal(ks, (MM_HIDDEN, NUM_SLOTS), dtype=jnp.float32)
    gamma = jnp.ones((MM_HIDDEN,), dtype=jnp.float32)          # LayerNorm weight
    beta = jnp.zeros((MM_HIDDEN,), dtype=jnp.float32)          # LayerNorm bias
    # readout: nn.Linear(mm_hidden, hidden, bias=False); stored as W^T (mm_hidden, hidden)
    w_readout_t = (jax.random.normal(kw, (MM_HIDDEN, HIDDEN), dtype=jnp.float32)
                   * (1.0 / np.sqrt(MM_HIDDEN)))

    out = spatial_slot_pool(x, slots, gamma, beta, w_readout_t)
    out = jax.block_until_ready(out)

    ref = _reference(x, slots, gamma, beta, w_readout_t)
    # Slightly relaxed tolerance: softmax normalization uses the EUP
    # approximate reciprocal (pl.reciprocal(approx=True)).
    np.testing.assert_allclose(np.asarray(out), np.asarray(ref),
                               rtol=5e-3, atol=5e-3)
    assert out.shape == (B, T, NUM_SLOTS, HIDDEN)
    print("KERNEL_OK")
</pallas_src>

<mosaic_0001>
module attributes {stable_mosaic.version = 11 : i64} {
  func.func @_spatial_slot_pool_kernel(%arg0: i32, %arg1: memref<3x16x64xf32, #tpu.memory_space<vmem>>, %arg2: memref<16x32xf32, #tpu.memory_space<vmem>>, %arg3: memref<16x32xf32, #tpu.memory_space<vmem>>, %arg4: memref<1x64xf32, #tpu.memory_space<vmem>>, %arg5: memref<1x64xf32, #tpu.memory_space<vmem>>, %arg6: memref<8x64xf32, #tpu.memory_space<vmem>>, %arg7: memref<64x128xf32, #tpu.memory_space<vmem>>, %arg8: memref<24x128xf32, #tpu.memory_space<vmem>>) attributes {dimension_semantics = [#tpu.dimension_semantics<parallel>], iteration_bounds = array<i64: 2>, scalar_prefetch = 0 : i64, scratch_operands = 0 : i64, tpu.core_type = #tpu.core_type<tc>, window_params = [{transform_indices = @transform_0, window_bounds = array<i64: 3, 16, 64>}, {pipeline_mode = #tpu.pipeline_mode<synchronous>, transform_indices = @transform_1, window_bounds = array<i64: 16, 32>}, {pipeline_mode = #tpu.pipeline_mode<synchronous>, transform_indices = @transform_2, window_bounds = array<i64: 16, 32>}, {pipeline_mode = #tpu.pipeline_mode<synchronous>, transform_indices = @transform_3, window_bounds = array<i64: 1, 64>}, {pipeline_mode = #tpu.pipeline_mode<synchronous>, transform_indices = @transform_4, window_bounds = array<i64: 1, 64>}, {pipeline_mode = #tpu.pipeline_mode<synchronous>, transform_indices = @transform_5, window_bounds = array<i64: 8, 64>}, {pipeline_mode = #tpu.pipeline_mode<synchronous>, transform_indices = @transform_6, window_bounds = array<i64: 64, 128>}, {transform_indices = @transform_7, window_bounds = array<i64: 24, 128>}]} {
    %c0 = arith.constant 0 : index
    %c0_0 = arith.constant 0 : index
    %c0_1 = arith.constant 0 : index
    %0 = vector.load %arg1[%c0, %c0_0, %c0_1] : memref<3x16x64xf32, #tpu.memory_space<vmem>>, vector<3x16x64xf32>
    %cst = arith.constant dense<0.000000e+00> : vector<3x16xf32>
    %1 = vector.multi_reduction <add>, %0, %cst [2] : vector<3x16x64xf32> to vector<3x16xf32>
    %2 = vector.shape_cast %1 : vector<3x16xf32> to vector<3x16x1xf32>
    %cst_2 = arith.constant 6.400000e+01 : f32
    %3 = vector.broadcast %cst_2 : f32 to vector<3x16x1xf32>
    %4 = arith.divf %2, %3 : vector<3x16x1xf32>
    %5 = arith.mulf %0, %0 : vector<3x16x64xf32>
    %cst_3 = arith.constant dense<0.000000e+00> : vector<3x16xf32>
    %6 = vector.multi_reduction <add>, %5, %cst_3 [2] : vector<3x16x64xf32> to vector<3x16xf32>
    %7 = vector.shape_cast %6 : vector<3x16xf32> to vector<3x16x1xf32>
    %cst_4 = arith.constant 6.400000e+01 : f32
    %8 = vector.broadcast %cst_4 : f32 to vector<3x16x1xf32>
    %9 = arith.divf %7, %8 : vector<3x16x1xf32>
    %10 = arith.mulf %4, %4 : vector<3x16x1xf32>
    %11 = arith.subf %9, %10 : vector<3x16x1xf32>
    %cst_5 = arith.constant 0.000000e+00 : f32
    %12 = vector.broadcast %cst_5 : f32 to vector<3x16x1xf32>
    %13 = arith.maximumf %11, %12 : vector<3x16x1xf32>
    %c0_6 = arith.constant 0 : index
    %c0_7 = arith.constant 0 : index
    %14 = vector.load %arg4[%c0_6, %c0_7] : memref<1x64xf32, #tpu.memory_space<vmem>>, vector<1x64xf32>
    %cst_8 = arith.constant 9.99999974E-6 : f32
    %15 = vector.broadcast %cst_8 : f32 to vector<3x16x1xf32>
    %16 = arith.addf %13, %15 : vector<3x16x1xf32>
    %17 = math.rsqrt %16 : vector<3x16x1xf32>
    %18 = vector.shape_cast %14 : vector<1x64xf32> to vector<1x1x64xf32>
    %19 = vector.broadcast %18 : vector<1x1x64xf32> to vector<3x16x64xf32>
    %20 = vector.broadcast %17 : vector<3x16x1xf32> to vector<3x16x64xf32>
    %21 = arith.mulf %19, %20 : vector<3x16x64xf32>
    %22 = vector.broadcast %4 : vector<3x16x1xf32> to vector<3x16x64xf32>
    %23 = arith.subf %0, %22 : vector<3x16x64xf32>
    %24 = arith.mulf %23, %21 : vector<3x16x64xf32>
    %c0_9 = arith.constant 0 : index
    %c0_10 = arith.constant 0 : index
    %25 = vector.load %arg5[%c0_9, %c0_10] : memref<1x64xf32, #tpu.memory_space<vmem>>, vector<1x64xf32>
    %26 = vector.shape_cast %25 : vector<1x64xf32> to vector<1x1x64xf32>
    %27 = vector.broadcast %26 : vector<1x1x64xf32> to vector<3x16x64xf32>
    %28 = arith.addf %24, %27 : vector<3x16x64xf32>
    %c0_11 = arith.constant 0 : index
    %c0_12 = arith.constant 0 : index
    %29 = vector.load %arg2[%c0_11, %c0_12] : memref<16x32xf32, #tpu.memory_space<vmem>>, vector<16x32xf32>
    %c0_13 = arith.constant 0 : index
    %c0_14 = arith.constant 0 : index
    %30 = vector.load %arg3[%c0_13, %c0_14] : memref<16x32xf32, #tpu.memory_space<vmem>>, vector<16x32xf32>
    %31 = vector.extract_strided_slice %28 {offsets = [0, 0, 0], sizes = [3, 16, 32], strides = [1, 1, 1]} : vector<3x16x64xf32> to vector<3x16x32xf32>
    %32 = vector.extract_strided_slice %28 {offsets = [0, 0, 32], sizes = [3, 16, 32], strides = [1, 1, 1]} : vector<3x16x64xf32> to vector<3x16x32xf32>
    %33 = vector.shape_cast %29 : vector<16x32xf32> to vector<1x16x32xf32>
    %34 = vector.broadcast %33 : vector<1x16x32xf32> to vector<3x16x32xf32>
    %35 = arith.mulf %31, %34 : vector<3x16x32xf32>
    %36 = vector.shape_cast %30 : vector<16x32xf32> to vector<1x16x32xf32>
    %37 = vector.broadcast %36 : vector<1x16x32xf32> to vector<3x16x32xf32>
    %38 = arith.mulf %32, %37 : vector<3x16x32xf32>
    %39 = arith.subf %35, %38 : vector<3x16x32xf32>
    %40 = vector.shape_cast %29 : vector<16x32xf32> to vector<1x16x32xf32>
    %41 = vector.broadcast %40 : vector<1x16x32xf32> to vector<3x16x32xf32>
    %42 = arith.mulf %32, %41 : vector<3x16x32xf32>
    %43 = vector.shape_cast %30 : vector<16x32xf32> to vector<1x16x32xf32>
    %44 = vector.broadcast %43 : vector<1x16x32xf32> to vector<3x16x32xf32>
    %45 = arith.mulf %31, %44 : vector<3x16x32xf32>
    %46 = arith.addf %42, %45 : vector<3x16x32xf32>
    %47 = tpu.concatenate %39, %46 in 2 : vector<3x16x32xf32>, vector<3x16x32xf32> -> vector<3x16x64xf32>
    %c0_15 = arith.constant 0 : index
    %c0_16 = arith.constant 0 : index
    %48 = vector.load %arg6[%c0_15, %c0_16] : memref<8x64xf32, #tpu.memory_space<vmem>>, vector<8x64xf32>
    %49 = vector.shape_cast %48 : vector<8x64xf32> to vector<1x8x64xf32>
    %50 = vector.broadcast %49 : vector<1x8x64xf32> to vector<3x8x64xf32>
    "tpu.trace_start"() <{level = 10 : i32, message = "bsd,bnd->bsn"}> : () -> ()
    %cst_17 = arith.constant dense<0.000000e+00> : vector<3x8x16xf32>
    %51 = tpu.matmul %50, %47, %cst_17 {dimension_numbers = #tpu.dot_dimension_numbers<[2], [2], [1], [1], [0, 0, 0, 1, 1, 1], [0], [0]>} : vector<3x8x64xf32>, vector<3x16x64xf32>, vector<3x8x16xf32> -> vector<3x8x16xf32>
    "tpu.trace_stop"() : () -> ()
    %cst_18 = arith.constant dense<0xFF800000> : vector<3x8xf32>
    %52 = vector.multi_reduction <maximumf>, %51, %cst_18 [2] : vector<3x8x16xf32> to vector<3x8xf32>
    %53 = vector.shape_cast %52 : vector<3x8xf32> to vector<3x8x1xf32>
    %54 = vector.broadcast %53 : vector<3x8x1xf32> to vector<3x8x16xf32>
    %55 = arith.subf %51, %54 : vector<3x8x16xf32>
    %56 = math.exp %55 : vector<3x8x16xf32>
    %cst_19 = arith.constant dense<0.000000e+00> : vector<3x8xf32>
    %57 = vector.multi_reduction <add>, %56, %cst_19 [2] : vector<3x8x16xf32> to vector<3x8xf32>
    %58 = vector.shape_cast %57 : vector<3x8xf32> to vector<3x8x1xf32>
    "tpu.trace_start"() <{level = 10 : i32, message = "bsn,bnd->bsd"}> : () -> ()
    %cst_20 = arith.constant dense<0.000000e+00> : vector<3x8x64xf32>
    %59 = tpu.matmul %56, %47, %cst_20 {dimension_numbers = #tpu.dot_dimension_numbers<[2], [1], [1], [2], [0, 0, 0, 1, 1, 2], [0], [0]>} : vector<3x8x16xf32>, vector<3x16x64xf32>, vector<3x8x64xf32> -> vector<3x8x64xf32>
    "tpu.trace_stop"() : () -> ()
    %60 = tpu.reciprocal %58 {approx = true} : vector<3x8x1xf32> -> vector<3x8x1xf32>
    %61 = vector.broadcast %60 : vector<3x8x1xf32> to vector<3x8x64xf32>
    %62 = arith.mulf %59, %61 : vector<3x8x64xf32>
    %63 = vector.shape_cast %62 : vector<3x8x64xf32> to vector<24x64xf32>
    %c0_21 = arith.constant 0 : index
    %c0_22 = arith.constant 0 : index
    %64 = vector.load %arg7[%c0_21, %c0_22] : memref<64x128xf32, #tpu.memory_space<vmem>>, vector<64x128xf32>
    %cst_23 = arith.constant dense<0.000000e+00> : vector<24x128xf32>
    %65 = tpu.matmul %63, %64, %cst_23 {dimension_numbers = #tpu.dot_dimension_numbers<[1], [0], [0], [1], [0, 0, 1, 1], [], []>} : vector<24x64xf32>, vector<64x128xf32>, vector<24x128xf32> -> vector<24x128xf32>
    %c0_24 = arith.constant 0 : index
    %c0_25 = arith.constant 0 : index
    %66 = vector.load %arg8[%c0_24, %c0_25] : memref<24x128xf32, #tpu.memory_space<vmem>>, vector<24x128xf32>
    tpu.vector_store %arg8[%c0_24, %c0_25], %65 {strides = array<i32>} : memref<24x128xf32, #tpu.memory_space<vmem>>, vector<24x128xf32>,
    return
  }
  func.func @transform_0(%arg0: i32) -> (i32, i32, i32) {
    %c0_i32 = arith.constant 0 : i32
    %c0_i32_0 = arith.constant 0 : i32
    %c0_i32_1 = arith.constant 0 : i32
    return %arg0, %c0_i32, %c0_i32_0 : i32, i32, i32
  }
  func.func @transform_1(%arg0: i32) -> (i32, i32) {
    %c0_i32 = arith.constant 0 : i32
    %c0_i32_0 = arith.constant 0 : i32
    %c0_i32_1 = arith.constant 0 : i32
    return %c0_i32, %c0_i32_0 : i32, i32
  }
  func.func @transform_2(%arg0: i32) -> (i32, i32) {
    %c0_i32 = arith.constant 0 : i32
    %c0_i32_0 = arith.constant 0 : i32
    %c0_i32_1 = arith.constant 0 : i32
    return %c0_i32, %c0_i32_0 : i32, i32
  }
  func.func @transform_3(%arg0: i32) -> (i32, i32) {
    %c0_i32 = arith.constant 0 : i32
    %c0_i32_0 = arith.constant 0 : i32
    %c0_i32_1 = arith.constant 0 : i32
    return %c0_i32, %c0_i32_0 : i32, i32
  }
  func.func @transform_4(%arg0: i32) -> (i32, i32) {
    %c0_i32 = arith.constant 0 : i32
    %c0_i32_0 = arith.constant 0 : i32
    %c0_i32_1 = arith.constant 0 : i32
    return %c0_i32, %c0_i32_0 : i32, i32
  }
  func.func @transform_5(%arg0: i32) -> (i32, i32) {
    %c0_i32 = arith.constant 0 : i32
    %c0_i32_0 = arith.constant 0 : i32
    %c0_i32_1 = arith.constant 0 : i32
    return %c0_i32, %c0_i32_0 : i32, i32
  }
  func.func @transform_6(%arg0: i32) -> (i32, i32) {
    %c0_i32 = arith.constant 0 : i32
    %c0_i32_0 = arith.constant 0 : i32
    %c0_i32_1 = arith.constant 0 : i32
    return %c0_i32, %c0_i32_0 : i32, i32
  }
  func.func @transform_7(%arg0: i32) -> (i32, i32) {
    %c0_i32 = arith.constant 0 : i32
    %c0_i32_0 = arith.constant 0 : i32
    return %arg0, %c0_i32 : i32, i32
  }
}

</mosaic_0001>

<llo_original>
// kernel: tpu_custom_call.1
$region0: #{tpu_custom_call.1}
  #allocation0 [shape = 'u32[]', space=smem, size = 0x4, offset = 0x4, fixed_abs, tag = 'smem constant byte address 0x4 - core index']
  #allocation1 [shape = 'u32[72,128]{1,0:T(1,128)}', space=vmem, size = 0x9000, scoped, tag = 'internal scratch']
  %s0 = inlined_call_operand.hbm [shape: f32[6,16,64], index: 0, kind: input, shape index: {}]
  %s1 = inlined_call_operand.hbm [shape: f32[16,32], index: 1, kind: input, shape index: {}]
  %s2 = inlined_call_operand.hbm [shape: f32[16,32], index: 2, kind: input, shape index: {}]
  %s3 = inlined_call_operand.vmem [shape: f32[1,64], index: 3, kind: input, shape index: {}]
  %s4 = inlined_call_operand.vmem [shape: f32[1,64], index: 4, kind: input, shape index: {}]
  %s5 = inlined_call_operand.hbm [shape: f32[8,64], index: 5, kind: input, shape index: {}]
  %s6 = inlined_call_operand.hbm [shape: f32[64,128], index: 6, kind: input, shape index: {}]
  %s7 = inlined_call_operand.hbm [shape: f32[48,128], index: 7, kind: output, shape index: {}]
  %s8 = sld [smem:[#allocation0]]
  $region81: #{tpu_custom_call.1} parent=0
    _
  %s10 = ssub.s32 1, %s8
  %s11 = scalar_select 0, %s10, %s8
  $region1: #{tpu_custom_call.1} parent=0
    #allocation2 [shape = 'u8[49152]{0}', space=vmem, size = 0xc000, scoped, tag = 'input window, operand 0']
    #allocation3 [shape = 's32[2]{0}', space=sflag, size = 0x8, scoped, tag = 'scoped memory for tpu_custom_call.1']
    #allocation4 [shape = 's32[2]{0}', space=sflag, size = 0x8, scoped, tag = 'scoped memory for tpu_custom_call.1']
    #allocation5 [shape = 'u8[8192]{0}', space=vmem, size = 0x2000, scoped, tag = 'input window, operand 1, single buffered']
    #allocation6 [shape = 's32[1]{0}', space=sflag, size = 0x4, scoped, tag = 'scoped memory for tpu_custom_call.1']
    #allocation7 [shape = 'u8[8192]{0}', space=vmem, size = 0x2000, scoped, tag = 'input window, operand 2, single buffered']
    #allocation8 [shape = 'u8[4096]{0}', space=vmem, size = 0x1000, scoped, tag = 'input window, operand 5, single buffered']
    #allocation9 [shape = 's32[1]{0}', space=sflag, size = 0x4, scoped, tag = 'scoped memory for tpu_custom_call.1']
    #allocation10 [shape = 'u8[32768]{0}', space=vmem, size = 0x8000, scoped, tag = 'input window, operand 6, single buffered']
    #allocation11 [shape = 'u8[24576]{0}', space=vmem, size = 0x6000, scoped, tag = 'output window, operand 0']
    %12 = vsyncpa [#allocation3], 0
    %s13 = scalar_lea.sflag [#allocation3], 1
    %14 = vsyncpa %s13, 0
    %15 = vsyncpa [#allocation6], 0
    %16 = vsyncpa [#allocation9], 0
    %17 = vsyncpa [#allocation4], 0
    %s18 = scalar_lea.sflag [#allocation4], 1
    %19 = vsyncpa %s18, 0
    loop: start=0, step=1, limit=4
    $region2: #{tpu_custom_call.1} parent=1 // loop_pre_header
      _
    $region3: #{tpu_custom_call.1} parent=1 // loop_header
      %s21 = sphi 0, %s25
      %p22 = scmp.ge.s32.totalorder %s21, 4
      %s31 = sphi 0, %s33
      %s34 = sphi 0, %s31
      %s35 = sphi 0, %s34
      %s51 = sphi 0, %s35
      %s55 = sphi 0, %s55
      %s57 = sphi 0, %s55
      %s58 = sphi 0, %s57
      %s72 = sphi 0, %s58
      %s76 = sphi 0, %s76
      %s78 = sphi 0, %s76
      %s79 = sphi 0, %s78
      %s93 = sphi 0, %s79
      %s97 = sphi 0, %s97
      %s99 = sphi 0, %s97
      %s100 = sphi 0, %s99
      %s114 = sphi 0, %s100
      %s118 = sphi 0, %s118
      %s120 = sphi 0, %s118
      %s121 = sphi 0, %s120
      %s135 = sphi 0, %s121
      %s139 = sphi 0, %s139
      %s141 = sphi 0, %s139
      %s142 = sphi 0, %s141
      %s156 = sphi 0, %s142
      %s160 = sphi 0, %s160
      %s162 = sphi 0, %s160
      %s163 = sphi 0, %s162
      %s177 = sphi 0, %s163
      %s183 = sphi 0, %s185
      %s186 = sphi 0, %s183
      %s187 = sphi 0, %s186
      %s203 = sphi 0, %s187
    $region4: #{tpu_custom_call.1} parent=1 // loop_header_branch
      %24 = sbr.rel (%p22) target = $region8
    $region5: #{tpu_custom_call.1} parent=1 // loop_body
      %s26 = ssub.s32 %s21, 1
      %s27 = ssub.s32 %s21, 2
      %s28 = sadd.s32 %s21, 1
      %s29 = ssub.s32 %s21, %s28
      %p30 = scmp.eq.s32.totalorder %s29, 0
      %s32 = sadd.s32 %s31, 1
      %s33 = scalar_select %p30, %s31, %s32
      %p36 = pneg %p30
      %p37 = scmp.eq.s32.totalorder %s21, 1
      %p38 = por %p36, %p37
      %p39 = scmp.ne.s32.totalorder %s31, %s34
      %p40 = scmp.eq.s32.totalorder %s21, 0
      %p41 = por %p39, %p40
      %p42 = scmp.ne.s32.totalorder %s31, %s34
      %p43 = scmp.eq.s32.totalorder %s26, 1
      %p44 = por %p42, %p43
      %p45 = scmp.ne.s32.totalorder %s34, %s35
      %p46 = scmp.eq.s32.totalorder %s26, 0
      %p47 = por %p45, %p46
      %p48 = scmp.ne.s32.totalorder %s34, %s35
      %p49 = scmp.eq.s32.totalorder %s27, 1
      %p50 = por %p48, %p49
      %p52 = scmp.ne.s32.totalorder %s35, %s51
      %p53 = scmp.eq.s32.totalorder %s27, 0
      %p54 = por %p52, %p53
      %s56 = sadd.s32 %s55, 1
      %p59 = scmp.eq.s32.totalorder %s21, 1
      %p60 = scmp.ne.s32.totalorder %s55, %s57
      %p61 = scmp.eq.s32.totalorder %s21, 0
      %p62 = por %p60, %p61
      %p63 = scmp.ne.s32.totalorder %s55, %s57
      %p64 = scmp.eq.s32.totalorder %s26, 1
      %p65 = por %p63, %p64
      %p66 = scmp.ne.s32.totalorder %s57, %s58
      %p67 = scmp.eq.s32.totalorder %s26, 0
      %p68 = por %p66, %p67
      %p69 = scmp.ne.s32.totalorder %s57, %s58
      %p70 = scmp.eq.s32.totalorder %s27, 1
      %p71 = por %p69, %p70
      %p73 = scmp.ne.s32.totalorder %s58, %s72
      %p74 = scmp.eq.s32.totalorder %s27, 0
      %p75 = por %p73, %p74
      %s77 = sadd.s32 %s76, 1
      %p80 = scmp.eq.s32.totalorder %s21, 1
      %p81 = scmp.ne.s32.totalorder %s76, %s78
      %p82 = scmp.eq.s32.totalorder %s21, 0
      %p83 = por %p81, %p82
      %p84 = scmp.ne.s32.totalorder %s76, %s78
      %p85 = scmp.eq.s32.totalorder %s26, 1
      %p86 = por %p84, %p85
      %p87 = scmp.ne.s32.totalorder %s78, %s79
      %p88 = scmp.eq.s32.totalorder %s26, 0
      %p89 = por %p87, %p88
      %p90 = scmp.ne.s32.totalorder %s78, %s79
      %p91 = scmp.eq.s32.totalorder %s27, 1
      %p92 = por %p90, %p91
      %p94 = scmp.ne.s32.totalorder %s79, %s93
      %p95 = scmp.eq.s32.totalorder %s27, 0
      %p96 = por %p94, %p95
      %s98 = sadd.s32 %s97, 1
      %p101 = scmp.eq.s32.totalorder %s21, 1
      %p102 = scmp.ne.s32.totalorder %s97, %s99
      %p103 = scmp.eq.s32.totalorder %s21, 0
      %p104 = por %p102, %p103
      %p105 = scmp.ne.s32.totalorder %s97, %s99
      %p106 = scmp.eq.s32.totalorder %s26, 1
      %p107 = por %p105, %p106
      %p108 = scmp.ne.s32.totalorder %s99, %s100
      %p109 = scmp.eq.s32.totalorder %s26, 0
      %p110 = por %p108, %p109
      %p111 = scmp.ne.s32.totalorder %s99, %s100
      %p112 = scmp.eq.s32.totalorder %s27, 1
      %p113 = por %p111, %p112
      %p115 = scmp.ne.s32.totalorder %s100, %s114
      %p116 = scmp.eq.s32.totalorder %s27, 0
      %p117 = por %p115, %p116
      %s119 = sadd.s32 %s118, 1
      %p122 = scmp.eq.s32.totalorder %s21, 1
      %p123 = scmp.ne.s32.totalorder %s118, %s120
      %p124 = scmp.eq.s32.totalorder %s21, 0
      %p125 = por %p123, %p124
      %p126 = scmp.ne.s32.totalorder %s118, %s120
      %p127 = scmp.eq.s32.totalorder %s26, 1
      %p128 = por %p126, %p127
      %p129 = scmp.ne.s32.totalorder %s120, %s121
      %p130 = scmp.eq.s32.totalorder %s26, 0
      %p131 = por %p129, %p130
      %p132 = scmp.ne.s32.totalorder %s120, %s121
      %p133 = scmp.eq.s32.totalorder %s27, 1
      %p134 = por %p132, %p133
      %p136 = scmp.ne.s32.totalorder %s121, %s135
      %p137 = scmp.eq.s32.totalorder %s27, 0
      %p138 = por %p136, %p137
      %s140 = sadd.s32 %s139, 1
      %p143 = scmp.eq.s32.totalorder %s21, 1
      %p144 = scmp.ne.s32.totalorder %s139, %s141
      %p145 = scmp.eq.s32.totalorder %s21, 0
      %p146 = por %p144, %p145
      %p147 = scmp.ne.s32.totalorder %s139, %s141
      %p148 = scmp.eq.s32.totalorder %s26, 1
      %p149 = por %p147, %p148
      %p150 = scmp.ne.s32.totalorder %s141, %s142
      %p151 = scmp.eq.s32.totalorder %s26, 0
      %p152 = por %p150, %p151
      %p153 = scmp.ne.s32.totalorder %s141, %s142
      %p154 = scmp.eq.s32.totalorder %s27, 1
      %p155 = por %p153, %p154
      %p157 = scmp.ne.s32.totalorder %s142, %s156
      %p158 = scmp.eq.s32.totalorder %s27, 0
      %p159 = por %p157, %p158
      %s161 = sadd.s32 %s160, 1
      %p164 = scmp.eq.s32.totalorder %s21, 1
      %p165 = scmp.ne.s32.totalorder %s160, %s162
      %p166 = scmp.eq.s32.totalorder %s21, 0
      %p167 = por %p165, %p166
      %p168 = scmp.ne.s32.totalorder %s160, %s162
      %p169 = scmp.eq.s32.totalorder %s26, 1
      %p170 = por %p168, %p169
      %p171 = scmp.ne.s32.totalorder %s162, %s163
      %p172 = scmp.eq.s32.totalorder %s26, 0
      %p173 = por %p171, %p172
      %p174 = scmp.ne.s32.totalorder %s162, %s163
      %p175 = scmp.eq.s32.totalorder %s27, 1
      %p176 = por %p174, %p175
      %p178 = scmp.ne.s32.totalorder %s163, %s177
      %p179 = scmp.eq.s32.totalorder %s27, 0
      %p180 = por %p178, %p179
      %s181 = ssub.s32 %s21, %s28
      %p182 = scmp.eq.s32.totalorder %s181, 0
      %s184 = sadd.s32 %s183, 1
      %s185 = scalar_select %p182, %s183, %s184
      %p188 = pneg %p182
      %p189 = scmp.eq.s32.totalorder %s21, 1
      %p190 = por %p188, %p189
      %p191 = scmp.ne.s32.totalorder %s183, %s186
      %p192 = scmp.eq.s32.totalorder %s21, 0
      %p193 = por %p191, %p192
      %p194 = scmp.ne.s32.totalorder %s183, %s186
      %p195 = scmp.eq.s32.totalorder %s26, 1
      %p196 = por %p194, %p195
      %p197 = scmp.ne.s32.totalorder %s186, %s187
      %p198 = scmp.eq.s32.totalorder %s26, 0
      %p199 = por %p197, %p198
      %p200 = scmp.ne.s32.totalorder %s186, %s187
      %p201 = scmp.eq.s32.totalorder %s27, 1
      %p202 = por %p200, %p201
      %p204 = scmp.ne.s32.totalorder %s187, %s203
      %p205 = scmp.eq.s32.totalorder %s27, 0
      %p206 = por %p204, %p205
      %p207 = scmp.le.s32.totalorder 1, %s21
      %p208 = scmp.lt.s32.totalorder %s21, 3
      %p209 = pnand %p207, %p208
      %p210 = pneg %p209
      // Predicated region
      $region9: #{tpu_custom_call.1} parent=5 // pred_check
        _
      $region10: #{tpu_custom_call.1} parent=5 // pred_check_branch
        %212 = sbr.rel (%p209) target = $region12
      $region11: #{tpu_custom_call.1} parent=5 // pred_region
        %s213 = ssub.s32 %s21, 1
        // Predicated region
        $region13: #{tpu_custom_call.1} parent=11 // pred_check
          %p214 = pneg %p68
        $region14: #{tpu_custom_call.1} parent=11 // pred_check_branch
          %216 = sbr.rel (%p214) target = $region16
        $region15: #{tpu_custom_call.1} parent=11 // pred_region
          %218 = vsyncadd [#allocation6], 0
          %s219 = sshll.u32 %s1, 4
          %s220 = int_to_ptr.hbm [resolvable:$true] %s219
          %s221 = sshll.u32 [#allocation5], 4
          %s222 = int_to_ptr.vmem [resolvable:$true] %s221
          %227 = dma.hbm_to_vmem [thread:$0]  %s220, 256, %s222, [#allocation6], 128, 128, 8
        $region16: #{tpu_custom_call.1} parent=11 // pred_fallthru
          _
        // Predicated region
        $region17: #{tpu_custom_call.1} parent=11 // pred_check
          %p228 = pneg %p89
        $region18: #{tpu_custom_call.1} parent=11 // pred_check_branch
          %230 = sbr.rel (%p228) target = $region20
        $region19: #{tpu_custom_call.1} parent=11 // pred_region
          %232 = vsyncadd [#allocation6], 0
          %s233 = sshll.u32 %s2, 4
          %s234 = int_to_ptr.hbm [resolvable:$true] %s233
          %s235 = sshll.u32 [#allocation7], 4
          %s236 = int_to_ptr.vmem [resolvable:$true] %s235
          %241 = dma.hbm_to_vmem [thread:$0]  %s234, 256, %s236, [#allocation6], 128, 128, 8
        $region20: #{tpu_custom_call.1} parent=11 // pred_fallthru
          _
        // Predicated region
        $region21: #{tpu_custom_call.1} parent=11 // pred_check
          %p242 = pneg %p110
        $region22: #{tpu_custom_call.1} parent=11 // pred_check_branch
          %244 = sbr.rel (%p242) target = $region24
        $region23: #{tpu_custom_call.1} parent=11 // pred_region
          _
        $region24: #{tpu_custom_call.1} parent=11 // pred_fallthru
          _
        // Predicated region
        $region25: #{tpu_custom_call.1} parent=11 // pred_check
          %p245 = pneg %p131
        $region26: #{tpu_custom_call.1} parent=11 // pred_check_branch
          %247 = sbr.rel (%p245) target = $region28
        $region27: #{tpu_custom_call.1} parent=11 // pred_region
          _
        $region28: #{tpu_custom_call.1} parent=11 // pred_fallthru
          _
        // Predicated region
        $region29: #{tpu_custom_call.1} parent=11 // pred_check
          %p248 = pneg %p152
        $region30: #{tpu_custom_call.1} parent=11 // pred_check_branch
          %250 = sbr.rel (%p248) target = $region32
        $region31: #{tpu_custom_call.1} parent=11 // pred_region
          %252 = vsyncadd [#allocation9], 0
          %s254 = sshll.u32 %s5, 4
          %s255 = int_to_ptr.hbm [resolvable:$true] %s254
          %s256 = sshll.u32 [#allocation8], 4
          %s257 = int_to_ptr.vmem [resolvable:$true] %s256
          %259 = dma.hbm_to_vmem [thread:$0]  %s255, 128, %s257, [#allocation9]
        $region32: #{tpu_custom_call.1} parent=11 // pred_fallthru
          _
        // Predicated region
        $region33: #{tpu_custom_call.1} parent=11 // pred_check
          %p260 = pneg %p173
        $region34: #{tpu_custom_call.1} parent=11 // pred_check_branch
          %262 = sbr.rel (%p260) target = $region36
        $region35: #{tpu_custom_call.1} parent=11 // pred_region
          %264 = vsyncadd [#allocation9], 0
          %s265 = sshll.u32 %s6, 4
          %s266 = int_to_ptr.hbm [resolvable:$true] %s265
          %s267 = sshll.u32 [#allocation10], 4
          %s268 = int_to_ptr.vmem [resolvable:$true] %s267
          %273 = dma.hbm_to_vmem [thread:$0]  %s266, 1024, %s268, [#allocation9], 128, 128, 8
        $region36: #{tpu_custom_call.1} parent=11 // pred_fallthru
          _
      $region12: #{tpu_custom_call.1} parent=5 // pred_fallthru
        _
      %p274 = scmp.lt.s32.totalorder %s21, 2
      // Predicated region
      $region37: #{tpu_custom_call.1} parent=5 // pred_check
        %p275 = pneg %p274
      $region38: #{tpu_custom_call.1} parent=5 // pred_check_branch
        %277 = sbr.rel (%p275) target = $region40
      $region39: #{tpu_custom_call.1} parent=5 // pred_region
        // Predicated region
        $region41: #{tpu_custom_call.1} parent=39 // pred_check
          %p278 = pneg %p41
        $region42: #{tpu_custom_call.1} parent=39 // pred_check_branch
          %280 = sbr.rel (%p278) target = $region44
        $region43: #{tpu_custom_call.1} parent=39 // pred_region
          %s281 = sand.u32 %s31, 1
          %s282 = scalar_lea.sflag [#allocation3], %s281
          %s283 = sand.u32 %s31, 1
          %s284 = smul.addr %s283, 48
          %s285 = scalar_lea.vmem [#allocation2], %s284
          %s286 = smul.u32 3, %s21
          %288 = vsyncadd %s282, 0
          %s289 = smul.addr %s286, 2
          %s290 = smul.addr %s289, 8
          %s291 = scalar_lea.hbm %s0, %s290
          %s292 = sshll.u32 %s291, 4
          %s293 = int_to_ptr.hbm [resolvable:$true] %s292
          %s294 = sshll.u32 %s285, 4
          %s295 = int_to_ptr.vmem [resolvable:$true] %s294
          %300 = dma.hbm_to_vmem [thread:$0]  %s293, 768, %s295, %s282, 128, 128, 8
        $region44: #{tpu_custom_call.1} parent=39 // pred_fallthru
          _
      $region40: #{tpu_custom_call.1} parent=5 // pred_fallthru
        _
      %p301 = scmp.le.s32.totalorder 1, %s21
      %p302 = scmp.lt.s32.totalorder %s21, 3
      %p303 = pnand %p301, %p302
      %p304 = pneg %p303
      // Predicated region
      $region45: #{tpu_custom_call.1} parent=5 // pred_check
        _
      $region46: #{tpu_custom_call.1} parent=5 // pred_check_branch
        %306 = sbr.rel (%p303) target = $region48
      $region47: #{tpu_custom_call.1} parent=5 // pred_region
        %s307 = ssub.s32 %s21, 1
        %s308 = sand.u32 %s34, 1
        %s309 = scalar_lea.sflag [#allocation3], %s308
        %s310 = sand.u32 %s34, 1
        %s311 = smul.addr %s310, 48
        %s312 = scalar_lea.vmem [#allocation2], %s311
        // Predicated region
        $region49: #{tpu_custom_call.1} parent=47 // pred_check
          %p313 = pneg %p47
        $region50: #{tpu_custom_call.1} parent=47 // pred_check_branch
          %315 = sbr.rel (%p313) target = $region52
        $region51: #{tpu_custom_call.1} parent=47 // pred_region
          %317 = dma.done %s309, 768
        $region52: #{tpu_custom_call.1} parent=47 // pred_fallthru
          _
        // Predicated region
        $region53: #{tpu_custom_call.1} parent=47 // pred_check
          %p318 = pneg %p68
        $region54: #{tpu_custom_call.1} parent=47 // pred_check_branch
          %320 = sbr.rel (%p318) target = $region56
        $region55: #{tpu_custom_call.1} parent=47 // pred_region
          %322 = dma.done [#allocation6], 256
        $region56: #{tpu_custom_call.1} parent=47 // pred_fallthru
          _
        // Predicated region
        $region57: #{tpu_custom_call.1} parent=47 // pred_check
          %p323 = pneg %p89
        $region58: #{tpu_custom_call.1} parent=47 // pred_check_branch
          %325 = sbr.rel (%p323) target = $region60
        $region59: #{tpu_custom_call.1} parent=47 // pred_region
          %327 = dma.done [#allocation6], 256
        $region60: #{tpu_custom_call.1} parent=47 // pred_fallthru
          _
        // Predicated region
        $region61: #{tpu_custom_call.1} parent=47 // pred_check
          %p328 = pneg %p152
        $region62: #{tpu_custom_call.1} parent=47 // pred_check_branch
          %330 = sbr.rel (%p328) target = $region64
        $region63: #{tpu_custom_call.1} parent=47 // pred_region
          %332 = dma.done [#allocation9], 128
        $region64: #{tpu_custom_call.1} parent=47 // pred_fallthru
          _
        // Predicated region
        $region65: #{tpu_custom_call.1} parent=47 // pred_check
          %p333 = pneg %p173
        $region66: #{tpu_custom_call.1} parent=47 // pred_check_branch
          %335 = sbr.rel (%p333) target = $region68
        $region67: #{tpu_custom_call.1} parent=47 // pred_region
          %337 = dma.done [#allocation9], 1024
        $region68: #{tpu_custom_call.1} parent=47 // pred_fallthru
          _
        %s338 = sand.u32 %s34, 1
        %s339 = scalar_lea.sflag [#allocation3], %s338
        %s340 = sand.u32 %s34, 1
        %s341 = smul.addr %s340, 48
        %s342 = scalar_lea.vmem [#allocation2], %s341
        %p343 = pneg %p47
        %p344 = pneg %p44
        %p345 = pneg %p68
        %p346 = pneg %p65
        %p347 = pneg %p89
        %p348 = pneg %p86
        %p349 = pneg %p110
        %p350 = pneg %p107
        %p351 = pneg %p131
        %p352 = pneg %p128
        %p353 = pneg %p152
        %p354 = pneg %p149
        %p355 = pneg %p173
        %p356 = pneg %p170
        %p357 = pneg %p199
        %p358 = pneg %p196
        %s359 = sand.u32 %s186, 1
        %s360 = scalar_lea.sflag [#allocation4], %s359
        %s361 = sand.u32 %s186, 1
        %s362 = smul.addr %s361, 24
        %s363 = scalar_lea.vmem [#allocation11], %s362
        %s364 = smul.u32 3, %s26
        %s365 = smul.u32 3, %s26
        %v366 = vld [vmem:[%s312] sm:$0xff]
        %v367 = vld [vmem:[%s312 + $0x8] sm:$0xff]
        %v368 = vld [vmem:[%s312 + $0x10] sm:$0xff]
        %v369 = vld [vmem:[%s312 + $0x18] sm:$0xff]
        %v370 = vld [vmem:[%s312 + $0x20] sm:$0xff]
        %v371 = vld [vmem:[%s312 + $0x28] sm:$0xff]
        %vm372 = vcmask 523264
        %v373 = vsel %vm372, %v366, 0.0
        %374 = vadd.xlane.f32.xlu0 %v373
        %v375 = vpop.xlane.xlu0 %374
        %v376 = vsel %vm372, %v367, 0.0
        %377 = vadd.xlane.f32.xlu0 %v376
        %v378 = vpop.xlane.xlu0 %377
        %v379 = vsel %vm372, %v368, 0.0
        %380 = vadd.xlane.f32.xlu0 %v379
        %v381 = vpop.xlane.xlu0 %380
        %v382 = vsel %vm372, %v369, 0.0
        %383 = vadd.xlane.f32.xlu0 %v382
        %v384 = vpop.xlane.xlu0 %383
        %v385 = vsel %vm372, %v370, 0.0
        %386 = vadd.xlane.f32.xlu0 %v385
        %v387 = vpop.xlane.xlu0 %386
        %v388 = vsel %vm372, %v371, 0.0
        %389 = vadd.xlane.f32.xlu0 %v388
        %v390 = vpop.xlane.xlu0 %389
        %v391 = vrcp.pop 64.0
        %v392 = vmul.f32 64.0, %v391
        %v393 = vsub.f32 1.0, %v392
        %v394 = vmul.f32 %v391, %v393
        %v395 = vadd.f32 %v391, %v394
        %vm396 = vweird.f32 %v391
        %v397 = vsel %vm396, %v391, %v395
        %v398 = vmul.f32 %v375, %v397
        %v399 = vmul.f32 %v378, %v397
        %v400 = vmul.f32 %v381, %v397
        %v401 = vmul.f32 %v384, %v397
        %v402 = vmul.f32 %v387, %v397
        %v403 = vmul.f32 %v390, %v397
        %v404 = vmul.f32 %v366, %v366
        %v405 = vmul.f32 %v367, %v367
        %v406 = vmul.f32 %v368, %v368
        %v407 = vmul.f32 %v369, %v369
        %v408 = vmul.f32 %v370, %v370
        %v409 = vmul.f32 %v371, %v371
        %v410 = vsel %vm372, %v404, 0.0
        %411 = vadd.xlane.f32.xlu0 %v410
        %v412 = vpop.xlane.xlu0 %411
        %v413 = vsel %vm372, %v405, 0.0
        %414 = vadd.xlane.f32.xlu0 %v413
        %v415 = vpop.xlane.xlu0 %414
        %v416 = vsel %vm372, %v406, 0.0
        %417 = vadd.xlane.f32.xlu0 %v416
        %v418 = vpop.xlane.xlu0 %417
        %v419 = vsel %vm372, %v407, 0.0
        %420 = vadd.xlane.f32.xlu0 %v419
        %v421 = vpop.xlane.xlu0 %420
        %v422 = vsel %vm372, %v408, 0.0
        %423 = vadd.xlane.f32.xlu0 %v422
        %v424 = vpop.xlane.xlu0 %423
        %v425 = vsel %vm372, %v409, 0.0
        %426 = vadd.xlane.f32.xlu0 %v425
        %v427 = vpop.xlane.xlu0 %426
        %v428 = vmul.f32 %v412, %v397
        %v429 = vmul.f32 %v415, %v397
        %v430 = vmul.f32 %v418, %v397
        %v431 = vmul.f32 %v421, %v397
        %v432 = vmul.f32 %v424, %v397
        %v433 = vmul.f32 %v427, %v397
        %v434 = vmul.f32 %v398, %v398
        %v435 = vmul.f32 %v399, %v399
        %v436 = vmul.f32 %v400, %v400
        %v437 = vmul.f32 %v401, %v401
        %v438 = vmul.f32 %v402, %v402
        %v439 = vmul.f32 %v403, %v403
        %v440 = vsub.f32 %v428, %v434
        %v441 = vsub.f32 %v429, %v435
        %v442 = vsub.f32 %v430, %v436
        %v443 = vsub.f32 %v431, %v437
        %v444 = vsub.f32 %v432, %v438
        %v445 = vsub.f32 %v433, %v439
        %v446 = vmax.f32 %v440, 0.0
        %v447 = vmax.f32 %v441, 0.0
        %v448 = vmax.f32 %v442, 0.0
        %v449 = vmax.f32 %v443, 0.0
        %v450 = vmax.f32 %v444, 0.0
        %v451 = vmax.f32 %v445, 0.0
        %v452 = vld [vmem:[%s3] sm:$0x1]
        %v453 = vadd.f32 %v446, 1e-05
        %v454 = vadd.f32 %v447, 1e-05
        %v455 = vadd.f32 %v448, 1e-05
        %v456 = vadd.f32 %v449, 1e-05
        %v457 = vadd.f32 %v450, 1e-05
        %v458 = vadd.f32 %v451, 1e-05
        %v459 = vrsqrt.pop %v453
        %v460 = vmul.f32 %v459, %v453
        %v461 = vmul.f32 %v460, %v459
        %v462 = vmul.f32 0.5, %v461
        %v463 = vsub.f32 1.5, %v462
        %v464 = vmul.f32 %v459, %v463
        %vm465 = vweird.f32 %v453
        %vm466 = vweird.f32 %v459
        %vm467 = vmor %vm465, %vm466
        %v468 = vsel %vm467, %v459, %v464
        %v469 = vrsqrt.pop %v454
        %v470 = vmul.f32 %v469, %v454
        %v471 = vmul.f32 %v470, %v469
        %v472 = vmul.f32 0.5, %v471
        %v473 = vsub.f32 1.5, %v472
        %v474 = vmul.f32 %v469, %v473
        %vm475 = vweird.f32 %v454
        %vm476 = vweird.f32 %v469
        %vm477 = vmor %vm475, %vm476
        %v478 = vsel %vm477, %v469, %v474
        %v479 = vrsqrt.pop %v455
        %v480 = vmul.f32 %v479, %v455
        %v481 = vmul.f32 %v480, %v479
        %v482 = vmul.f32 0.5, %v481
        %v483 = vsub.f32 1.5, %v482
        %v484 = vmul.f32 %v479, %v483
        %vm485 = vweird.f32 %v455
        %vm486 = vweird.f32 %v479
        %vm487 = vmor %vm485, %vm486
        %v488 = vsel %vm487, %v479, %v484
        %v489 = vrsqrt.pop %v456
        %v490 = vmul.f32 %v489, %v456
        %v491 = vmul.f32 %v490, %v489
        %v492 = vmul.f32 0.5, %v491
        %v493 = vsub.f32 1.5, %v492
        %v494 = vmul.f32 %v489, %v493
        %vm495 = vweird.f32 %v456
        %vm496 = vweird.f32 %v489
        %vm497 = vmor %vm495, %vm496
        %v498 = vsel %vm497, %v489, %v494
        %v499 = vrsqrt.pop %v457
        %v500 = vmul.f32 %v499, %v457
        %v501 = vmul.f32 %v500, %v499
        %v502 = vmul.f32 0.5, %v501
        %v503 = vsub.f32 1.5, %v502
        %v504 = vmul.f32 %v499, %v503
        %vm505 = vweird.f32 %v457
        %vm506 = vweird.f32 %v499
        %vm507 = vmor %vm505, %vm506
        %v508 = vsel %vm507, %v499, %v504
        %v509 = vrsqrt.pop %v458
        %v510 = vmul.f32 %v509, %v458
        %v511 = vmul.f32 %v510, %v509
        %v512 = vmul.f32 0.5, %v511
        %v513 = vsub.f32 1.5, %v512
        %v514 = vmul.f32 %v509, %v513
        %vm515 = vweird.f32 %v458
        %vm516 = vweird.f32 %v509
        %vm517 = vmor %vm515, %vm516
        %v518 = vsel %vm517, %v509, %v514
        %v520 = vperm.slane %v452, 0
        %v522 = vmul.f32 %v520, %v468
        %v523 = vmul.f32 %v520, %v478
        %v524 = vmul.f32 %v520, %v488
        %v525 = vmul.f32 %v520, %v498
        %v526 = vmul.f32 %v520, %v508
        %v527 = vmul.f32 %v520, %v518
        %v528 = vsub.f32 %v366, %v398
        %v529 = vsub.f32 %v367, %v399
        %v530 = vsub.f32 %v368, %v400
        %v531 = vsub.f32 %v369, %v401
        %v532 = vsub.f32 %v370, %v402
        %v533 = vsub.f32 %v371, %v403
        %v534 = vmul.f32 %v528, %v522
        %v535 = vmul.f32 %v529, %v523
        %v536 = vmul.f32 %v530, %v524
        %v537 = vmul.f32 %v531, %v525
        %v538 = vmul.f32 %v532, %v526
        %v539 = vmul.f32 %v533, %v527
        %v540 = vld [vmem:[%s4] sm:$0x1]
        %v542 = vperm.slane %v540, 0
        %v544 = vadd.f32 %v534, %v542
        %v545 = vadd.f32 %v535, %v542
        %v546 = vadd.f32 %v536, %v542
        %v547 = vadd.f32 %v537, %v542
        %v548 = vadd.f32 %v538, %v542
        %v549 = vadd.f32 %v539, %v542
        %v550 = vld [vmem:[#allocation5] sm:$0xff]
        %v551 = vld [vmem:[#allocation5 + $0x8] sm:$0xff]
        %v552 = vld [vmem:[#allocation7] sm:$0xff]
        %v553 = vld [vmem:[#allocation7 + $0x8] sm:$0xff]
        %v554 = vmul.f32 %v544, %v550
        %v555 = vmul.f32 %v545, %v551
        %v556 = vmul.f32 %v546, %v550
        %v557 = vmul.f32 %v547, %v551
        %v558 = vmul.f32 %v548, %v550
        %v559 = vmul.f32 %v549, %v551
        %562 = vrot.lane.b32.xlu0 %v552, 32
        %v563 = vpop.permute.xlu0 %562
        %564 = vrot.lane.b32.xlu0 %v553, 32
        %v565 = vpop.permute.xlu0 %564
        %v568 = vmul.f32 %v544, %v563
        %v569 = vmul.f32 %v545, %v565
        %v570 = vmul.f32 %v546, %v563
        %v571 = vmul.f32 %v547, %v565
        %v572 = vmul.f32 %v548, %v563
        %v573 = vmul.f32 %v549, %v565
        %580 = vrot.lane.b32.xlu0 %v568, 96
        %v581 = vpop.permute.xlu0 %580
        %582 = vrot.lane.b32.xlu0 %v569, 96
        %v583 = vpop.permute.xlu0 %582
        %584 = vrot.lane.b32.xlu0 %v570, 96
        %v585 = vpop.permute.xlu0 %584
        %586 = vrot.lane.b32.xlu0 %v571, 96
        %v587 = vpop.permute.xlu0 %586
        %588 = vrot.lane.b32.xlu0 %v572, 96
        %v589 = vpop.permute.xlu0 %588
        %590 = vrot.lane.b32.xlu0 %v573, 96
        %v591 = vpop.permute.xlu0 %590
        %v598 = vsub.f32 %v554, %v581
        %v599 = vsub.f32 %v555, %v583
        %v600 = vsub.f32 %v556, %v585
        %v601 = vsub.f32 %v557, %v587
        %v602 = vsub.f32 %v558, %v589
        %v603 = vsub.f32 %v559, %v591
        %606 = vrot.lane.b32.xlu0 %v550, 32
        %v607 = vpop.permute.xlu0 %606
        %608 = vrot.lane.b32.xlu0 %v551, 32
        %v609 = vpop.permute.xlu0 %608
        %v612 = vmul.f32 %v544, %v607
        %v613 = vmul.f32 %v545, %v609
        %v614 = vmul.f32 %v546, %v607
        %v615 = vmul.f32 %v547, %v609
        %v616 = vmul.f32 %v548, %v607
        %v617 = vmul.f32 %v549, %v609
        %v618 = vmul.f32 %v544, %v552
        %v619 = vmul.f32 %v545, %v553
        %v620 = vmul.f32 %v546, %v552
        %v621 = vmul.f32 %v547, %v553
        %v622 = vmul.f32 %v548, %v552
        %v623 = vmul.f32 %v549, %v553
        %630 = vrot.lane.b32.xlu0 %v618, 32
        %v631 = vpop.permute.xlu0 %630
        %632 = vrot.lane.b32.xlu0 %v619, 32
        %v633 = vpop.permute.xlu0 %632
        %634 = vrot.lane.b32.xlu0 %v620, 32
        %v635 = vpop.permute.xlu0 %634
        %636 = vrot.lane.b32.xlu0 %v621, 32
        %v637 = vpop.permute.xlu0 %636
        %638 = vrot.lane.b32.xlu0 %v622, 32
        %v639 = vpop.permute.xlu0 %638
        %640 = vrot.lane.b32.xlu0 %v623, 32
        %v641 = vpop.permute.xlu0 %640
        %v648 = vadd.f32 %v612, %v631
        %v649 = vadd.f32 %v613, %v633
        %v650 = vadd.f32 %v614, %v635
        %v651 = vadd.f32 %v615, %v637
        %v652 = vadd.f32 %v616, %v639
        %v653 = vadd.f32 %v617, %v641
        %vm654 = vcmask 261120
        %v655 = vsel %vm654, %v598, %v648
        %v656 = vsel %vm654, %v599, %v649
        %v657 = vsel %vm654, %v600, %v650
        %v658 = vsel %vm654, %v601, %v651
        %v659 = vsel %vm654, %v602, %v652
        %v660 = vsel %vm654, %v603, %v653
        %v661 = vld [vmem:[#allocation8] sm:$0xff]
        %v663 = vsel %vm372, %v661, 0
        %v666 = vsel %vm372, %v655, 0
        %v669 = vsel %vm372, %v656, 0
        %671 = vmatpush.xpose.msra.mxu0 0.0
        %672 = vmatpush.xpose.msra.mxu0 0.0
        %673 = vmatpush.xpose.msra.mxu0 0.0
        %674 = vmatpush.xpose.msra.mxu0 0.0
        %675 = vmatpush.xpose.msra.mxu0 0.0
        %676 = vmatpush.xpose.msra.mxu0 0.0
        %677 = vmatpush.xpose.msra.mxu0 0.0
        %678 = vmatpush.xpose.msra.mxu0 0.0
        %679 = vmatpush.xpose.msra.mxu0 0.0
        %680 = vmatpush.xpose.msra.mxu0 0.0
        %681 = vmatpush.xpose.msra.mxu0 0.0
        %682 = vmatpush.xpose.msra.mxu0 0.0
        %683 = vmatpush.xpose.msra.mxu0 0.0
        %684 = vmatpush.xpose.msra.mxu0 0.0
        %685 = vmatpush.xpose.msra.mxu0 %v669
        %686 = vmatpush.xpose.msra.mxu0 %v666
        %687 = vmatmul.f32.gmra.mxu0 %v663
        %v688 = vpop.f32.mrf.mxu0
        %v689 = vadd.f32 0.0, %v688
        %690 = vdwg.mxu0
        %v692 = vsel %vm372, %v657, 0
        %v695 = vsel %vm372, %v658, 0
        %697 = vmatpush.xpose.msra.mxu0 0.0
        %698 = vmatpush.xpose.msra.mxu0 0.0
        %699 = vmatpush.xpose.msra.mxu0 0.0
        %700 = vmatpush.xpose.msra.mxu0 0.0
        %701 = vmatpush.xpose.msra.mxu0 0.0
        %702 = vmatpush.xpose.msra.mxu0 0.0
        %703 = vmatpush.xpose.msra.mxu0 0.0
        %704 = vmatpush.xpose.msra.mxu0 0.0
        %705 = vmatpush.xpose.msra.mxu0 0.0
        %706 = vmatpush.xpose.msra.mxu0 0.0
        %707 = vmatpush.xpose.msra.mxu0 0.0
        %708 = vmatpush.xpose.msra.mxu0 0.0
        %709 = vmatpush.xpose.msra.mxu0 0.0
        %710 = vmatpush.xpose.msra.mxu0 0.0
        %711 = vmatpush.xpose.msra.mxu0 %v695
        %712 = vmatpush.xpose.msra.mxu0 %v692
        %713 = vmatmul.f32.gmra.mxu0 %v663
        %v714 = vpop.f32.mrf.mxu0
        %v715 = vadd.f32 0.0, %v714
        %716 = vdwg.mxu0
        %v718 = vsel %vm372, %v659, 0
        %v721 = vsel %vm372, %v660, 0
        %723 = vmatpush.xpose.msra.mxu0 0.0
        %724 = vmatpush.xpose.msra.mxu0 0.0
        %725 = vmatpush.xpose.msra.mxu0 0.0
        %726 = vmatpush.xpose.msra.mxu0 0.0
        %727 = vmatpush.xpose.msra.mxu0 0.0
        %728 = vmatpush.xpose.msra.mxu0 0.0
        %729 = vmatpush.xpose.msra.mxu0 0.0
        %730 = vmatpush.xpose.msra.mxu0 0.0
        %731 = vmatpush.xpose.msra.mxu0 0.0
        %732 = vmatpush.xpose.msra.mxu0 0.0
        %733 = vmatpush.xpose.msra.mxu0 0.0
        %734 = vmatpush.xpose.msra.mxu0 0.0
        %735 = vmatpush.xpose.msra.mxu0 0.0
        %736 = vmatpush.xpose.msra.mxu0 0.0
        %737 = vmatpush.xpose.msra.mxu0 %v721
        %738 = vmatpush.xpose.msra.mxu0 %v718
        %739 = vmatmul.f32.gmra.mxu0 %v663
        %v740 = vpop.f32.mrf.mxu0
        %v741 = vadd.f32 0.0, %v740
        %742 = vdwg.mxu0
        %vm743 = vcmask 130048
        %v744 = vsel %vm743, %v689, -inf
        %745 = vmax.xlane.f32.xlu0 %v744
        %v746 = vpop.xlane.xlu0 %745
        %v747 = vsel %vm743, %v715, -inf
        %748 = vmax.xlane.f32.xlu0 %v747
        %v749 = vpop.xlane.xlu0 %748
        %v750 = vsel %vm743, %v741, -inf
        %751 = vmax.xlane.f32.xlu0 %v750
        %v752 = vpop.xlane.xlu0 %751
        %v753 = vsub.f32 %v689, %v746
        %v754 = vsub.f32 %v715, %v749
        %v755 = vsub.f32 %v741, %v752
        %v756 = vmul.f32 %v753, 1.442695
        %v757 = vpow.pop %v756
        %v758 = vmul.f32 %v754, 1.442695
        %v759 = vpow.pop %v758
        %v760 = vmul.f32 %v755, 1.442695
        %v761 = vpow.pop %v760
        %v762 = vsel %vm743, %v757, 0.0
        %763 = vadd.xlane.f32.xlu0 %v762
        %v764 = vpop.xlane.xlu0 %763
        %v765 = vsel %vm743, %v759, 0.0
        %766 = vadd.xlane.f32.xlu0 %v765
        %v767 = vpop.xlane.xlu0 %766
        %v768 = vsel %vm743, %v761, 0.0
        %769 = vadd.xlane.f32.xlu0 %v768
        %v770 = vpop.xlane.xlu0 %769
        %v772 = vsel %vm743, %v757, 0
        %774 = vmatpush.msra.mxu0 0.0
        %775 = vmatpush.msra.mxu0 0.0
        %776 = vmatpush.msra.mxu0 0.0
        %777 = vmatpush.msra.mxu0 0.0
        %778 = vmatpush.msra.mxu0 0.0
        %779 = vmatpush.msra.mxu0 0.0
        %780 = vmatpush.msra.mxu0 0.0
        %781 = vmatpush.msra.mxu0 0.0
        %782 = vmatpush.msra.mxu0 0.0
        %783 = vmatpush.msra.mxu0 0.0
        %784 = vmatpush.msra.mxu0 0.0
        %785 = vmatpush.msra.mxu0 0.0
        %786 = vmatpush.msra.mxu0 0.0
        %787 = vmatpush.msra.mxu0 0.0
        %788 = vmatpush.msra.mxu0 %v656
        %789 = vmatpush.msra.mxu0 %v655
        %790 = vmatmul.f32.gmra.mxu0 %v772
        %v791 = vpop.f32.mrf.mxu0
        %v792 = vadd.f32 0.0, %v791
        %793 = vdwg.mxu0
        %v795 = vsel %vm743, %v759, 0
        %797 = vmatpush.msra.mxu0 0.0
        %798 = vmatpush.msra.mxu0 0.0
        %799 = vmatpush.msra.mxu0 0.0
        %800 = vmatpush.msra.mxu0 0.0
        %801 = vmatpush.msra.mxu0 0.0
        %802 = vmatpush.msra.mxu0 0.0
        %803 = vmatpush.msra.mxu0 0.0
        %804 = vmatpush.msra.mxu0 0.0
        %805 = vmatpush.msra.mxu0 0.0
        %806 = vmatpush.msra.mxu0 0.0
        %807 = vmatpush.msra.mxu0 0.0
        %808 = vmatpush.msra.mxu0 0.0
        %809 = vmatpush.msra.mxu0 0.0
        %810 = vmatpush.msra.mxu0 0.0
        %811 = vmatpush.msra.mxu0 %v658
        %812 = vmatpush.msra.mxu0 %v657
        %813 = vmatmul.f32.gmra.mxu0 %v795
        %v814 = vpop.f32.mrf.mxu0
        %v815 = vadd.f32 0.0, %v814
        %816 = vdwg.mxu0
        %v818 = vsel %vm743, %v761, 0
        %820 = vmatpush.msra.mxu0 0.0
        %821 = vmatpush.msra.mxu0 0.0
        %822 = vmatpush.msra.mxu0 0.0
        %823 = vmatpush.msra.mxu0 0.0
        %824 = vmatpush.msra.mxu0 0.0
        %825 = vmatpush.msra.mxu0 0.0
        %826 = vmatpush.msra.mxu0 0.0
        %827 = vmatpush.msra.mxu0 0.0
        %828 = vmatpush.msra.mxu0 0.0
        %829 = vmatpush.msra.mxu0 0.0
        %830 = vmatpush.msra.mxu0 0.0
        %831 = vmatpush.msra.mxu0 0.0
        %832 = vmatpush.msra.mxu0 0.0
        %833 = vmatpush.msra.mxu0 0.0
        %834 = vmatpush.msra.mxu0 %v660
        %835 = vmatpush.msra.mxu0 %v659
        %836 = vmatmul.f32.gmra.mxu0 %v818
        %v837 = vpop.f32.mrf.mxu0
        %v838 = vadd.f32 0.0, %v837
        %839 = vdwg.mxu0
        %v840 = vrcp.pop %v764
        %v841 = vrcp.pop %v767
        %v842 = vrcp.pop %v770
        %v843 = vmul.f32 %v792, %v840
        %v844 = vmul.f32 %v815, %v841
        %v845 = vmul.f32 %v838, %v842
        %v846 = vld [vmem:[#allocation10] sm:$0xff]
        %v847 = vld [vmem:[#allocation10 + $0x8] sm:$0xff]
        %v848 = vld [vmem:[#allocation10 + $0x10] sm:$0xff]
        %v849 = vld [vmem:[#allocation10 + $0x18] sm:$0xff]
        %v850 = vld [vmem:[#allocation10 + $0x20] sm:$0xff]
        %v851 = vld [vmem:[#allocation10 + $0x28] sm:$0xff]
        %v852 = vld [vmem:[#allocation10 + $0x30] sm:$0xff]
        %v853 = vld [vmem:[#allocation10 + $0x38] sm:$0xff]
        %v855 = vsel %vm372, %v843, 0
        %v858 = vsel %vm372, %v844, 0
        %v861 = vsel %vm372, %v845, 0
        %863 = vmatpush.msra.mxu0 0.0
        %864 = vmatpush.msra.mxu0 0.0
        %865 = vmatpush.msra.mxu0 0.0
        %866 = vmatpush.msra.mxu0 0.0
        %867 = vmatpush.msra.mxu0 0.0
        %868 = vmatpush.msra.mxu0 0.0
        %869 = vmatpush.msra.mxu0 0.0
        %870 = vmatpush.msra.mxu0 0.0
        %871 = vmatpush.msra.mxu0 %v853
        %872 = vmatpush.msra.mxu0 %v852
        %873 = vmatpush.msra.mxu0 %v851
        %874 = vmatpush.msra.mxu0 %v850
        %875 = vmatpush.msra.mxu0 %v849
        %876 = vmatpush.msra.mxu0 %v848
        %877 = vmatpush.msra.mxu0 %v847
        %878 = vmatpush.msra.mxu0 %v846
        %879 = vmatmul.f32.gmra.mxu0 %v855
        %v880 = vpop.f32.mrf.mxu0
        %v881 = vadd.f32 0.0, %v880
        %882 = vmatmul.f32.gmra.mxu0 %v858
        %v883 = vpop.f32.mrf.mxu0
        %v884 = vadd.f32 0.0, %v883
        %885 = vmatmul.f32.gmra.mxu0 %v861
        %v886 = vpop.f32.mrf.mxu0
        %v887 = vadd.f32 0.0, %v886
        %888 = vdwg.mxu0
        %889 = vst [vmem:[%s363] sm:$0xff] %v881
        %890 = vst [vmem:[%s363 + $0x8] sm:$0xff] %v884
        %891 = vst [vmem:[%s363 + $0x10] sm:$0xff] %v887
        %s892 = sand.u32 %s186, 1
        %s893 = scalar_lea.sflag [#allocation4], %s892
        %s894 = sand.u32 %s186, 1
        %s895 = smul.addr %s894, 24
        %s896 = scalar_lea.vmem [#allocation11], %s895
        // Predicated region
        $region69: #{tpu_custom_call.1} parent=47 // pred_check
          %p897 = pneg %p196
        $region70: #{tpu_custom_call.1} parent=47 // pred_check_branch
          %899 = sbr.rel (%p897) target = $region72
        $region71: #{tpu_custom_call.1} parent=47 // pred_region
          %s900 = smul.u32 3, %s26
          %902 = vsyncadd %s893, 0
          %s903 = smul.addr %s900, 8
          %s904 = scalar_lea.hbm %s7, %s903
          %s905 = sshll.u32 %s896, 4
          %s906 = int_to_ptr.vmem [resolvable:$true] %s905
          %s907 = sshll.u32 %s904, 4
          %s908 = int_to_ptr.hbm [resolvable:$true] %s907
          %913 = dma.vmem_to_hbm [thread:$0]  %s906, 384, %s908, %s893, 128, 128, 8
        $region72: #{tpu_custom_call.1} parent=47 // pred_fallthru
          _
      $region48: #{tpu_custom_call.1} parent=5 // pred_fallthru
        _
      %p914 = scmp.le.s32.totalorder 2, %s21
      // Predicated region
      $region73: #{tpu_custom_call.1} parent=5 // pred_check
        %p915 = pneg %p914
      $region74: #{tpu_custom_call.1} parent=5 // pred_check_branch
        %917 = sbr.rel (%p915) target = $region76
      $region75: #{tpu_custom_call.1} parent=5 // pred_region
        %s918 = ssub.s32 %s21, 2
        // Predicated region
        $region77: #{tpu_custom_call.1} parent=75 // pred_check
          %p919 = pneg %p202
        $region78: #{tpu_custom_call.1} parent=75 // pred_check_branch
          %921 = sbr.rel (%p919) target = $region80
        $region79: #{tpu_custom_call.1} parent=75 // pred_region
          %s922 = sand.u32 %s187, 1
          %s923 = scalar_lea.sflag [#allocation4], %s922
          %s924 = sand.u32 %s187, 1
          %s925 = smul.addr %s924, 24
          %s926 = scalar_lea.vmem [#allocation11], %s925
          %928 = dma.done %s923, 384
        $region80: #{tpu_custom_call.1} parent=75 // pred_fallthru
          _
      $region76: #{tpu_custom_call.1} parent=5 // pred_fallthru
        _
    $region6: #{tpu_custom_call.1} parent=1 // loop_footer
      %s25 = sadd.s32 1, %s21
    $region7: #{tpu_custom_call.1} parent=1 // loop_footer_branch
      %20 = sbr.rel target = $region3
    $region8: #{tpu_custom_call.1} parent=1 // loop_exit
      _
    %929 = vsyncpa [#allocation3], 1
    %s930 = scalar_lea.sflag [#allocation3], 1
    %931 = vsyncpa %s930, 1
    %932 = vsyncpa [#allocation6], 1
    %933 = vsyncpa [#allocation9], 1
    %934 = vsyncpa [#allocation4], 1
    %s935 = scalar_lea.sflag [#allocation4], 1
    %936 = vsyncpa %s935, 1

</llo_original>
